<compile_context>
chip_gen: v7x
topology: tpu7x:2x2x1
jax: 0.10.0
libtpu: 0.0.40
codegen_flags: <defaults>
</compile_context>

<pallas_src>
import functools

import jax
import jax.numpy as jnp
from jax.experimental import pallas as pl
from jax.experimental.pallas import tpu as pltpu


def _round_up(x, m):
    return ((x + m - 1) // m) * m


def _cls_bce_kernel(tile_cnt_ref, h_ref, w_ref, b_ref, code_ref,
                    loss_ref, acc_ref, cnt_ref, *, n_tok, n_classes, tm):
    """Fused classifier-head matmul + masked weighted BCE + accuracy.

    tile_cnt_ref: (G,)    i32  SMEM  masked-token count per row tile (prefetch)
    h_ref:        (TM,H)  bf16 VMEM  hidden states for this row tile
    w_ref:        (H,C)   bf16 VMEM  stacked classifier weights   (resident)
    b_ref:        (1,C)   f32  VMEM  stacked classifier biases    (resident)
    code_ref:     (TM,C)  f32  VMEM  0 = unmasked, 1 = masked&y=0, 2 = masked&y=1
    loss_ref / acc_ref / cnt_ref: (1,1) f32 resident accumulators
    """
    i = pl.program_id(0)

    @pl.when(i == 0)
    def _init():
        loss_ref[...] = jnp.zeros_like(loss_ref)
        acc_ref[...] = jnp.zeros_like(acc_ref)
        cnt_ref[...] = jnp.zeros_like(cnt_ref)

    @pl.when(tile_cnt_ref[i] > 0)          # skip fully-masked row tiles
    def _compute():
        # (TM, C) logits on the MXU: bf16 operands, f32 accumulation.
        x = jnp.dot(h_ref[...], w_ref[...],
                    preferred_element_type=jnp.float32) + b_ref[...]

        # Sanitize ragged-tail rows (out-of-bounds block rows read garbage).
        row = i * tm + jax.lax.broadcasted_iota(jnp.int32, x.shape, 0)
        code = jnp.where(row < n_tok, code_ref[...], 0.0)
        is_masked = code > 0.5
        y_is_one = code > 1.5
        y = y_is_one.astype(jnp.float32)

        # Per-element BCE weight: 1 if positive class else 1/(n_classes-1).
        w_cls = jnp.where(y_is_one, 1.0, 1.0 / (n_classes - 1))

        # Numerically-stable BCE-with-logits (matches torch BCEWithLogitsLoss),
        # all f32 on VPU/EUP.
        bce = (jnp.maximum(x, 0.0) - x * y
               + jnp.log(1.0 + jnp.exp(-jnp.abs(x))))

        correct = (x >= 0.5) == y_is_one     # torch: (logits >= 0.5).long() == y

        loss_ref[...] = loss_ref[...] + jnp.sum(
            jnp.where(is_masked, w_cls * bce, 0.0))
        acc_ref[...] = acc_ref[...] + jnp.sum(
            jnp.where(is_masked & correct, 1.0, 0.0))
        cnt_ref[...] = cnt_ref[...] + jnp.sum(
            jnp.where(is_masked, 1.0, 0.0))


def _fused_head_loss(h_flat, w, b, code, tile_counts, *, n_tok, n_classes, tm):
    """Tiled pallas_call over token-row tiles; returns (loss_sum, acc_sum, cnt)."""
    g = tile_counts.shape[0]
    hid = h_flat.shape[1]
    kernel = functools.partial(_cls_bce_kernel, n_tok=n_tok,
                               n_classes=n_classes, tm=tm)
    loss_sum, acc_sum, cnt = pl.pallas_call(
        kernel,
        out_shape=(jax.ShapeDtypeStruct((1, 1), jnp.float32),) * 3,
        grid_spec=pltpu.PrefetchScalarGridSpec(
            num_scalar_prefetch=1,
            grid=(g,),
            in_specs=[
                pl.BlockSpec((tm, hid), lambda i, tc: (i, 0)),        # hidden stream
                pl.BlockSpec((hid, n_classes), lambda i, tc: (0, 0)),  # W (resident)
                pl.BlockSpec((1, n_classes), lambda i, tc: (0, 0)),    # bias (resident)
                pl.BlockSpec((tm, n_classes), lambda i, tc: (i, 0)),   # mask/label code
            ],
            out_specs=(
                pl.BlockSpec((1, 1), lambda i, tc: (0, 0)),
                pl.BlockSpec((1, 1), lambda i, tc: (0, 0)),
                pl.BlockSpec((1, 1), lambda i, tc: (0, 0)),
            ),
        ),
        compiler_params=pltpu.CompilerParams(
            dimension_semantics=("arbitrary",)),   # row axis is a reduction
    )(tile_counts, h_flat, w, b, code)
    return loss_sum[0, 0], acc_sum[0, 0], cnt[0, 0]


@jax.jit
def oracle_binary_classifier_forward(input_ids, attention_mask, labels, params):
    bz, seqlen = input_ids.shape
    hid, n_classes = params["cls_w"].shape

    # --- stand-in transformer body (glue; gather == glue) -------------------
    # TODO(synk): the pretrained AutoModel backbone (multi-layer attention over
    # attention_mask) and the stochastic Dropout have no clean single-kernel
    # Pallas equivalent; replaced by tok+pos embeddings / identity.
    pos = jnp.arange(seqlen, dtype=jnp.int32)
    h = params["tok_emb"][input_ids] + params["pos_emb"][pos][None, :, :]   # (B,L,H) f32

    n_tok = bz * seqlen
    h_flat = h.reshape(n_tok, hid).astype(jnp.bfloat16)        # bf16 MXU operand
    w = params["cls_w"].astype(jnp.bfloat16)                   # bf16 MXU operand
    b = params["cls_b"].reshape(1, n_classes).astype(jnp.float32)

    # Per-(batch, class) binary labels and per-token loss mask, packed into a
    # single small (n_tok, C) side stream:
    #   code = 0 -> unmasked, 1 -> masked & y=0, 2 -> masked & y=1
    y_bc = labels[:, None] == jnp.arange(n_classes, dtype=labels.dtype)[None, :]
    m_bt = attention_mask == 1
    code = jnp.where(m_bt[:, :, None],
                     1.0 + y_bc[:, None, :].astype(jnp.float32),
                     0.0).reshape(n_tok, n_classes)

    # Row tiling: MXU/sublane aligned; ragged tail is masked inside the kernel.
    tm = min(256, _round_up(n_tok, 8))
    g = pl.cdiv(n_tok, tm)

    # Per-row-tile masked-token counts -> SMEM scalar prefetch (tile skipping).
    m_tok = jnp.pad(m_bt.reshape(-1).astype(jnp.int32), (0, g * tm - n_tok))
    tile_counts = m_tok.reshape(g, tm).sum(axis=1).astype(jnp.int32)

    loss_sum, acc_sum, cnt = _fused_head_loss(
        h_flat, w, b, code, tile_counts,
        n_tok=n_tok, n_classes=n_classes, tm=tm)

    loss = loss_sum / cnt           # mean over masked elements (NaN if none, as in torch)
    acc = acc_sum / cnt
    n_loss = cnt.astype(jnp.int32)  # loss_mask.sum()
    return loss, acc, n_loss


def _reference_forward(input_ids, attention_mask, labels, params):
    """Pure-JAX reference of the module forward (same stand-in backbone)."""
    bz, seqlen = input_ids.shape
    hid, n_classes = params["cls_w"].shape
    pos = jnp.arange(seqlen, dtype=jnp.int32)
    h = params["tok_emb"][input_ids] + params["pos_emb"][pos][None, :, :]
    x = jnp.dot(h.reshape(bz * seqlen, hid).astype(jnp.bfloat16),
                params["cls_w"].astype(jnp.bfloat16),
                preferred_element_type=jnp.float32)
    x = x.reshape(bz, seqlen, n_classes) + params["cls_b"][None, None, :]
    y = (labels[:, None] == jnp.arange(n_classes))[:, None, :].astype(jnp.float32)
    y = jnp.broadcast_to(y, x.shape)
    m = jnp.broadcast_to((attention_mask == 1)[:, :, None], x.shape)
    w_cls = jnp.where(y > 0.5, 1.0, 1.0 / (n_classes - 1))
    bce = jnp.maximum(x, 0.0) - x * y + jnp.log(1.0 + jnp.exp(-jnp.abs(x)))
    cnt = jnp.sum(m.astype(jnp.float32))
    loss = jnp.sum(jnp.where(m, w_cls * bce, 0.0)) / cnt
    acc = jnp.sum(jnp.where(m & ((x >= 0.5) == (y > 0.5)), 1.0, 0.0)) / cnt
    return loss, acc, cnt.astype(jnp.int32)


if __name__ == "__main__":
    B, L, H, C, V = 2, 16, 32, 4, 64
    key = jax.random.PRNGKey(0)
    k_tok, k_pos, k_w, k_b, k_ids = jax.random.split(key, 5)

    params = {
        "tok_emb": 0.05 * jax.random.normal(k_tok, (V, H), jnp.float32),
        "pos_emb": 0.05 * jax.random.normal(k_pos, (L, H), jnp.float32),
        "cls_w": 0.5 * jax.random.normal(k_w, (H, C), jnp.float32),
        "cls_b": 0.1 * jax.random.normal(k_b, (C,), jnp.float32),
    }

    input_ids = jax.random.randint(k_ids, (B, L), 0, V, dtype=jnp.int32)
    # padded HF-style batch: second row has 5 padding tokens
    attention_mask = jnp.array([[1] * L, [1] * 11 + [0] * (L - 11)], dtype=jnp.int32)
    labels = jnp.array([1, 3], dtype=jnp.int32)

    loss, acc, n_loss = oracle_binary_classifier_forward(
        input_ids, attention_mask, labels, params)
    jax.block_until_ready((loss, acc, n_loss))

    ref_loss, ref_acc, ref_n = _reference_forward(
        input_ids, attention_mask, labels, params)

    assert int(n_loss) == int(ref_n), (int(n_loss), int(ref_n))
    assert jnp.isfinite(loss) and jnp.isfinite(acc)
    assert jnp.allclose(loss, ref_loss, rtol=1e-4, atol=1e-4), (loss, ref_loss)
    assert jnp.allclose(acc, ref_acc, rtol=1e-4, atol=1e-4), (acc, ref_acc)
    print("KERNEL_OK")
</pallas_src>

<mosaic_0001>
module attributes {stable_mosaic.version = 11 : i64} {
  func.func @_cls_bce_kernel(%arg0: i32, %arg1: memref<1xi32, #tpu.memory_space<smem>>, %arg2: memref<32x32xbf16, #tpu.memory_space<vmem>>, %arg3: memref<32x4xbf16, #tpu.memory_space<vmem>>, %arg4: memref<1x4xf32, #tpu.memory_space<vmem>>, %arg5: memref<32x4xf32, #tpu.memory_space<vmem>>, %arg6: memref<1x1xf32, #tpu.memory_space<vmem>>, %arg7: memref<1x1xf32, #tpu.memory_space<vmem>>, %arg8: memref<1x1xf32, #tpu.memory_space<vmem>>) attributes {dimension_semantics = [#tpu.dimension_semantics<arbitrary>], iteration_bounds = array<i64: 1>, scalar_prefetch = 1 : i64, scratch_operands = 0 : i64, tpu.core_type = #tpu.core_type<tc>, window_params = [{transform_indices = @transform_0, window_bounds = array<i64: 32, 32>}, {pipeline_mode = #tpu.pipeline_mode<synchronous>, transform_indices = @transform_1, window_bounds = array<i64: 32, 4>}, {pipeline_mode = #tpu.pipeline_mode<synchronous>, transform_indices = @transform_2, window_bounds = array<i64: 1, 4>}, {transform_indices = @transform_3, window_bounds = array<i64: 32, 4>}, {pipeline_mode = #tpu.pipeline_mode<synchronous>, transform_indices = @transform_4, window_bounds = array<i64: 1, 1>}, {pipeline_mode = #tpu.pipeline_mode<synchronous>, transform_indices = @transform_5, window_bounds = array<i64: 1, 1>}, {pipeline_mode = #tpu.pipeline_mode<synchronous>, transform_indices = @transform_6, window_bounds = array<i64: 1, 1>}]} {
    %c0_i32 = arith.constant 0 : i32
    %0 = arith.cmpi eq, %arg0, %c0_i32 : i32
    %1 = arith.extui %0 : i1 to i32
    %c0_i32_0 = arith.constant 0 : i32
    %2 = arith.cmpi ne, %1, %c0_i32_0 : i32
    scf.if %2 {
      %cst = arith.constant 0.000000e+00 : f32
      %8 = vector.broadcast %cst : f32 to vector<1x1xf32>
      %c0 = arith.constant 0 : index
      %c0_3 = arith.constant 0 : index
      %9 = vector.load %arg6[%c0, %c0_3] : memref<1x1xf32, #tpu.memory_space<vmem>>, vector<1x1xf32>
      tpu.vector_store %arg6[%c0, %c0_3], %8 {strides = array<i32>} : memref<1x1xf32, #tpu.memory_space<vmem>>, vector<1x1xf32>,
      %cst_4 = arith.constant 0.000000e+00 : f32
      %10 = vector.broadcast %cst_4 : f32 to vector<1x1xf32>
      %c0_5 = arith.constant 0 : index
      %c0_6 = arith.constant 0 : index
      %11 = vector.load %arg7[%c0_5, %c0_6] : memref<1x1xf32, #tpu.memory_space<vmem>>, vector<1x1xf32>
      tpu.vector_store %arg7[%c0_5, %c0_6], %10 {strides = array<i32>} : memref<1x1xf32, #tpu.memory_space<vmem>>, vector<1x1xf32>,
      %cst_7 = arith.constant 0.000000e+00 : f32
      %12 = vector.broadcast %cst_7 : f32 to vector<1x1xf32>
      %c0_8 = arith.constant 0 : index
      %c0_9 = arith.constant 0 : index
      %13 = vector.load %arg8[%c0_8, %c0_9] : memref<1x1xf32, #tpu.memory_space<vmem>>, vector<1x1xf32>
      tpu.vector_store %arg8[%c0_8, %c0_9], %12 {strides = array<i32>} : memref<1x1xf32, #tpu.memory_space<vmem>>, vector<1x1xf32>,
    } else {
    }
    %3 = arith.index_cast %arg0 : i32 to index
    %4 = memref.load %arg1[%3] : memref<1xi32, #tpu.memory_space<smem>>
    %c0_i32_1 = arith.constant 0 : i32
    %5 = arith.cmpi sgt, %4, %c0_i32_1 : i32
    %6 = arith.extui %5 : i1 to i32
    %c0_i32_2 = arith.constant 0 : i32
    %7 = arith.cmpi ne, %6, %c0_i32_2 : i32
    scf.if %7 {
      %c0 = arith.constant 0 : index
      %c0_3 = arith.constant 0 : index
      %8 = vector.load %arg2[%c0, %c0_3] : memref<32x32xbf16, #tpu.memory_space<vmem>>, vector<32x32xbf16>
      %c0_4 = arith.constant 0 : index
      %c0_5 = arith.constant 0 : index
      %9 = vector.load %arg3[%c0_4, %c0_5] : memref<32x4xbf16, #tpu.memory_space<vmem>>, vector<32x4xbf16>
      %cst = arith.constant dense<0.000000e+00> : vector<32x4xf32>
      %10 = tpu.matmul %8, %9, %cst {dimension_numbers = #tpu.dot_dimension_numbers<[1], [0], [0], [1], [0, 0, 1, 1], [], []>} : vector<32x32xbf16>, vector<32x4xbf16>, vector<32x4xf32> -> vector<32x4xf32>
      %c0_6 = arith.constant 0 : index
      %c0_7 = arith.constant 0 : index
      %11 = vector.load %arg4[%c0_6, %c0_7] : memref<1x4xf32, #tpu.memory_space<vmem>>, vector<1x4xf32>
      %12 = vector.broadcast %11 : vector<1x4xf32> to vector<32x4xf32>
      %13 = arith.addf %10, %12 : vector<32x4xf32>
      %c32_i32 = arith.constant 32 : i32
      %14 = arith.muli %arg0, %c32_i32 : i32
      %15 = tpu.iota {dimensions = array<i32: 0>} : vector<32x4xi32>
      %16 = vector.broadcast %14 : i32 to vector<32x4xi32>
      %17 = arith.addi %16, %15 : vector<32x4xi32>
      %c32_i32_8 = arith.constant 32 : i32
      %18 = vector.broadcast %c32_i32_8 : i32 to vector<32x4xi32>
      %19 = arith.cmpi slt, %17, %18 : vector<32x4xi32>
      %c0_9 = arith.constant 0 : index
      %c0_10 = arith.constant 0 : index
      %20 = vector.load %arg5[%c0_9, %c0_10] : memref<32x4xf32, #tpu.memory_space<vmem>>, vector<32x4xf32>
      %cst_11 = arith.constant 0.000000e+00 : f32
      %21 = vector.broadcast %cst_11 : f32 to vector<32x4xf32>
      %22 = arith.select %19, %20, %21 : vector<32x4xi1>, vector<32x4xf32>
      %cst_12 = arith.constant 5.000000e-01 : f32
      %23 = vector.broadcast %cst_12 : f32 to vector<32x4xf32>
      %24 = arith.cmpf ogt, %22, %23 : vector<32x4xf32>
      %cst_13 = arith.constant 1.500000e+00 : f32
      %25 = vector.broadcast %cst_13 : f32 to vector<32x4xf32>
      %26 = arith.cmpf ogt, %22, %25 : vector<32x4xf32>
      %27 = arith.extui %26 : vector<32x4xi1> to vector<32x4xi32>
      %28 = arith.sitofp %27 : vector<32x4xi32> to vector<32x4xf32>
      %cst_14 = arith.constant 1.000000e+00 : f32
      %cst_15 = arith.constant 0.333333343 : f32
      %29 = vector.broadcast %cst_14 : f32 to vector<32x4xf32>
      %30 = vector.broadcast %cst_15 : f32 to vector<32x4xf32>
      %31 = arith.select %26, %29, %30 : vector<32x4xi1>, vector<32x4xf32>
      %cst_16 = arith.constant 0.000000e+00 : f32
      %32 = vector.broadcast %cst_16 : f32 to vector<32x4xf32>
      %33 = arith.maximumf %13, %32 : vector<32x4xf32>
      %34 = arith.mulf %13, %28 : vector<32x4xf32>
      %35 = arith.subf %33, %34 : vector<32x4xf32>
      %36 = math.absf %13 : vector<32x4xf32>
      %cst_17 = arith.constant 0.000000e+00 : f32
      %37 = vector.broadcast %cst_17 : f32 to vector<32x4xf32>
      %38 = arith.subf %37, %36 : vector<32x4xf32>
      %39 = math.exp %38 : vector<32x4xf32>
      %cst_18 = arith.constant 1.000000e+00 : f32
      %40 = vector.broadcast %cst_18 : f32 to vector<32x4xf32>
      %41 = arith.addf %40, %39 : vector<32x4xf32>
      %42 = math.log %41 : vector<32x4xf32>
      %43 = arith.addf %35, %42 : vector<32x4xf32>
      %cst_19 = arith.constant 5.000000e-01 : f32
      %44 = vector.broadcast %cst_19 : f32 to vector<32x4xf32>
      %45 = arith.cmpf oge, %13, %44 : vector<32x4xf32>
      %46 = arith.xori %45, %26 : vector<32x4xi1>
      %cst_20 = arith.constant dense<true> : vector<32x4xi1>
      %47 = arith.xori %46, %cst_20 : vector<32x4xi1>
      %c0_21 = arith.constant 0 : index
      %c0_22 = arith.constant 0 : index
      %48 = vector.load %arg6[%c0_21, %c0_22] : memref<1x1xf32, #tpu.memory_space<vmem>>, vector<1x1xf32>
      %49 = arith.mulf %31, %43 : vector<32x4xf32>
      %cst_23 = arith.constant 0.000000e+00 : f32
      %50 = vector.broadcast %cst_23 : f32 to vector<32x4xf32>
      %51 = arith.select %24, %49, %50 : vector<32x4xi1>, vector<32x4xf32>
      %52 = vector.shape_cast %51 : vector<32x4xf32> to vector<1x32x4xf32>
      %cst_24 = arith.constant dense<0.000000e+00> : vector<1xf32>
      %53 = vector.multi_reduction <add>, %52, %cst_24 [1, 2] : vector<1x32x4xf32> to vector<1xf32>
      %54 = vector.shape_cast %53 : vector<1xf32> to vector<1x1x1xf32>
      %55 = vector.extract %54[0, 0, 0] : f32 from vector<1x1x1xf32>
      %56 = vector.broadcast %55 : f32 to vector<1x1xf32>
      %57 = arith.addf %48, %56 : vector<1x1xf32>
      %c0_25 = arith.constant 0 : index
      %c0_26 = arith.constant 0 : index
      %58 = vector.load %arg6[%c0_25, %c0_26] : memref<1x1xf32, #tpu.memory_space<vmem>>, vector<1x1xf32>
      tpu.vector_store %arg6[%c0_25, %c0_26], %57 {strides = array<i32>} : memref<1x1xf32, #tpu.memory_space<vmem>>, vector<1x1xf32>,
      %c0_27 = arith.constant 0 : index
      %c0_28 = arith.constant 0 : index
      %59 = vector.load %arg7[%c0_27, %c0_28] : memref<1x1xf32, #tpu.memory_space<vmem>>, vector<1x1xf32>
      %60 = arith.andi %24, %47 : vector<32x4xi1>
      %cst_29 = arith.constant 1.000000e+00 : f32
      %cst_30 = arith.constant 0.000000e+00 : f32
      %61 = vector.broadcast %cst_29 : f32 to vector<32x4xf32>
      %62 = vector.broadcast %cst_30 : f32 to vector<32x4xf32>
      %63 = arith.select %60, %61, %62 : vector<32x4xi1>, vector<32x4xf32>
      %64 = vector.shape_cast %63 : vector<32x4xf32> to vector<1x32x4xf32>
      %cst_31 = arith.constant dense<0.000000e+00> : vector<1xf32>
      %65 = vector.multi_reduction <add>, %64, %cst_31 [1, 2] : vector<1x32x4xf32> to vector<1xf32>
      %66 = vector.shape_cast %65 : vector<1xf32> to vector<1x1x1xf32>
      %67 = vector.extract %66[0, 0, 0] : f32 from vector<1x1x1xf32>
      %68 = vector.broadcast %67 : f32 to vector<1x1xf32>
      %69 = arith.addf %59, %68 : vector<1x1xf32>
      %c0_32 = arith.constant 0 : index
      %c0_33 = arith.constant 0 : index
      %70 = vector.load %arg7[%c0_32, %c0_33] : memref<1x1xf32, #tpu.memory_space<vmem>>, vector<1x1xf32>
      tpu.vector_store %arg7[%c0_32, %c0_33], %69 {strides = array<i32>} : memref<1x1xf32, #tpu.memory_space<vmem>>, vector<1x1xf32>,
      %c0_34 = arith.constant 0 : index
      %c0_35 = arith.constant 0 : index
      %71 = vector.load %arg8[%c0_34, %c0_35] : memref<1x1xf32, #tpu.memory_space<vmem>>, vector<1x1xf32>
      %cst_36 = arith.constant 1.000000e+00 : f32
      %cst_37 = arith.constant 0.000000e+00 : f32
      %72 = vector.broadcast %cst_36 : f32 to vector<32x4xf32>
      %73 = vector.broadcast %cst_37 : f32 to vector<32x4xf32>
      %74 = arith.select %24, %72, %73 : vector<32x4xi1>, vector<32x4xf32>
      %75 = vector.shape_cast %74 : vector<32x4xf32> to vector<1x32x4xf32>
      %cst_38 = arith.constant dense<0.000000e+00> : vector<1xf32>
      %76 = vector.multi_reduction <add>, %75, %cst_38 [1, 2] : vector<1x32x4xf32> to vector<1xf32>
      %77 = vector.shape_cast %76 : vector<1xf32> to vector<1x1x1xf32>
      %78 = vector.extract %77[0, 0, 0] : f32 from vector<1x1x1xf32>
      %79 = vector.broadcast %78 : f32 to vector<1x1xf32>
      %80 = arith.addf %71, %79 : vector<1x1xf32>
      %c0_39 = arith.constant 0 : index
      %c0_40 = arith.constant 0 : index
      %81 = vector.load %arg8[%c0_39, %c0_40] : memref<1x1xf32, #tpu.memory_space<vmem>>, vector<1x1xf32>
      tpu.vector_store %arg8[%c0_39, %c0_40], %80 {strides = array<i32>} : memref<1x1xf32, #tpu.memory_space<vmem>>, vector<1x1xf32>,
    } else {
    }
    return
  }
  func.func @transform_0(%arg0: i32, %arg1: memref<1xi32, #tpu.memory_space<smem>>) -> (i32, i32) {
    %c0_i32 = arith.constant 0 : i32
    %c0_i32_0 = arith.constant 0 : i32
    return %arg0, %c0_i32 : i32, i32
  }
  func.func @transform_1(%arg0: i32, %arg1: memref<1xi32, #tpu.memory_space<smem>>) -> (i32, i32) {
    %c0_i32 = arith.constant 0 : i32
    %c0_i32_0 = arith.constant 0 : i32
    %c0_i32_1 = arith.constant 0 : i32
    return %c0_i32, %c0_i32_0 : i32, i32
  }
  func.func @transform_2(%arg0: i32, %arg1: memref<1xi32, #tpu.memory_space<smem>>) -> (i32, i32) {
    %c0_i32 = arith.constant 0 : i32
    %c0_i32_0 = arith.constant 0 : i32
    %c0_i32_1 = arith.constant 0 : i32
    return %c0_i32, %c0_i32_0 : i32, i32
  }
  func.func @transform_3(%arg0: i32, %arg1: memref<1xi32, #tpu.memory_space<smem>>) -> (i32, i32) {
    %c0_i32 = arith.constant 0 : i32
    %c0_i32_0 = arith.constant 0 : i32
    return %arg0, %c0_i32 : i32, i32
  }
  func.func @transform_4(%arg0: i32, %arg1: memref<1xi32, #tpu.memory_space<smem>>) -> (i32, i32) {
    %c0_i32 = arith.constant 0 : i32
    %c0_i32_0 = arith.constant 0 : i32
    %c0_i32_1 = arith.constant 0 : i32
    return %c0_i32, %c0_i32_0 : i32, i32
  }
  func.func @transform_5(%arg0: i32, %arg1: memref<1xi32, #tpu.memory_space<smem>>) -> (i32, i32) {
    %c0_i32 = arith.constant 0 : i32
    %c0_i32_0 = arith.constant 0 : i32
    %c0_i32_1 = arith.constant 0 : i32
    return %c0_i32, %c0_i32_0 : i32, i32
  }
  func.func @transform_6(%arg0: i32, %arg1: memref<1xi32, #tpu.memory_space<smem>>) -> (i32, i32) {
    %c0_i32 = arith.constant 0 : i32
    %c0_i32_0 = arith.constant 0 : i32
    %c0_i32_1 = arith.constant 0 : i32
    return %c0_i32, %c0_i32_0 : i32, i32
  }
}

</mosaic_0001>

<llo_original>
// kernel: oracle_binary_classifier_forward.1
$region0: #{oracle_binary_classifier_forward.1}
  #allocation0 [shape = 'u32[]', space=smem, size = 0x4, offset = 0x4, fixed_abs, tag = 'smem constant byte address 0x4 - core index']
  #allocation1 [shape = 'u32[144,128]{1,0:T(1,128)}', space=vmem, size = 0x12000, scoped, tag = 'internal scratch']
  #allocation2 [shape = 's32[1]{0}', space=sflag, size = 0x4, scoped, tag = 'scoped memory for oracle_binary_classifier_forward.1']
  #allocation3 [shape = 's32[1]{0:T(128)S(6)}', space=smem, size = 0x200, scoped, tag = 'prefetched SMEM operand 0']
  %s0 = inlined_call_operand.<no memory space> [shape: s32[1], index: 0, kind: input, shape index: {}]
  %s1 = inlined_call_operand.vmem [shape: bf16[32,32], index: 1, kind: input, shape index: {}]
  %s2 = inlined_call_operand.vmem [shape: bf16[32,4], index: 2, kind: input, shape index: {}]
  %s3 = inlined_call_operand.vmem [shape: f32[1,4], index: 3, kind: input, shape index: {}]
  %s4 = inlined_call_operand.vmem [shape: f32[32,4], index: 4, kind: input, shape index: {}]
  %s5 = inlined_call_operand.hbm [shape: f32[1,1], index: 5, kind: output, shape index: {0}]
  %s6 = inlined_call_operand.hbm [shape: f32[1,1], index: 6, kind: output, shape index: {1}]
  %s7 = inlined_call_operand.hbm [shape: f32[1,1], index: 7, kind: output, shape index: {2}]
  %8 = xla_tuple %s5, %s6, %s7
  %s9 = sld [smem:[#allocation0]]
  $region50: #{oracle_binary_classifier_forward.1} parent=0
    _
  %s11 = ssub.s32 1, %s9
  %s12 = scalar_select 0, %s11, %s9
  %13 = sst [smem:[#allocation3]] %s0
  $region1: #{oracle_binary_classifier_forward.1} parent=0
    #allocation4 [shape = 'u8[512]{0}', space=vmem, size = 0x400, scoped, tag = 'output window, operand 0, single buffered']
    #allocation5 [shape = 's32[1]{0}', space=sflag, size = 0x4, scoped, tag = 'scoped memory for oracle_binary_classifier_forward.1']
    #allocation6 [shape = 'u8[512]{0}', space=vmem, size = 0x400, scoped, tag = 'output window, operand 1, single buffered']
    #allocation7 [shape = 's32[1]{0}', space=sflag, size = 0x4, scoped, tag = 'scoped memory for oracle_binary_classifier_forward.1']
    #allocation8 [shape = 'u8[512]{0}', space=vmem, size = 0x400, scoped, tag = 'output window, operand 2, single buffered']
    %14 = vsyncpa [#allocation5], 0
    %15 = vsyncpa [#allocation7], 0
    // Predicated region
    $region2: #{oracle_binary_classifier_forward.1} parent=1 // pred_check
      _
    $region3: #{oracle_binary_classifier_forward.1} parent=1 // pred_check_branch
      %17 = sbr.rel (0) target = $region5
    $region4: #{oracle_binary_classifier_forward.1} parent=1 // pred_region
      _
    $region5: #{oracle_binary_classifier_forward.1} parent=1 // pred_fallthru
      _
    // Predicated region
    $region6: #{oracle_binary_classifier_forward.1} parent=1 // pred_check
      _
    $region7: #{oracle_binary_classifier_forward.1} parent=1 // pred_check_branch
      %19 = sbr.rel (0) target = $region9
    $region8: #{oracle_binary_classifier_forward.1} parent=1 // pred_region
      _
    $region9: #{oracle_binary_classifier_forward.1} parent=1 // pred_fallthru
      _
    // Predicated region
    $region10: #{oracle_binary_classifier_forward.1} parent=1 // pred_check
      _
    $region11: #{oracle_binary_classifier_forward.1} parent=1 // pred_check_branch
      %21 = sbr.rel (0) target = $region13
    $region12: #{oracle_binary_classifier_forward.1} parent=1 // pred_region
      _
    $region13: #{oracle_binary_classifier_forward.1} parent=1 // pred_fallthru
      _
    // Predicated region
    $region14: #{oracle_binary_classifier_forward.1} parent=1 // pred_check
      _
    $region15: #{oracle_binary_classifier_forward.1} parent=1 // pred_check_branch
      %23 = sbr.rel (0) target = $region17
    $region16: #{oracle_binary_classifier_forward.1} parent=1 // pred_region
      _
    $region17: #{oracle_binary_classifier_forward.1} parent=1 // pred_fallthru
      _
    %p25 = scmp.eq.s32.totalorder 0, 0
    // Predicated region
    $region18: #{oracle_binary_classifier_forward.1} parent=1 // pred_check
      %p26 = pneg %p25
    $region19: #{oracle_binary_classifier_forward.1} parent=1 // pred_check_branch
      %28 = sbr.rel (%p26) target = $region21
    $region20: #{oracle_binary_classifier_forward.1} parent=1 // pred_region
      %vm29 = vcmask 0
      %30 = vst.msk [vmem:[#allocation4] sm:$0x1] %vm29, 0.0
      %31 = vst.msk [vmem:[#allocation6] sm:$0x1] %vm29, 0.0
      %32 = vst.msk [vmem:[#allocation8] sm:$0x1] %vm29, 0.0
    $region21: #{oracle_binary_classifier_forward.1} parent=1 // pred_fallthru
      _
    %s33 = sld [smem:[#allocation3]]
    %p34 = scmp.gt.s32.totalorder %s33, 0
    // Predicated region
    $region22: #{oracle_binary_classifier_forward.1} parent=1 // pred_check
      %p35 = pneg %p34
    $region23: #{oracle_binary_classifier_forward.1} parent=1 // pred_check_branch
      %37 = sbr.rel (%p35) target = $region25
    $region24: #{oracle_binary_classifier_forward.1} parent=1 // pred_region
      %v38 = vld [vmem:[%s1] sm:$0xf]
      %v39 = vld [vmem:[%s1 + $0x4] sm:$0xf]
      %v40 = vld [vmem:[%s1 + $0x8] sm:$0xf]
      %v41 = vld [vmem:[%s1 + $0xc] sm:$0xf]
      %v42 = vld [vmem:[%s2] sm:$0xf]
      %v43 = vld [vmem:[%s2 + $0x4] sm:$0xf]
      %v44 = vld [vmem:[%s2 + $0x8] sm:$0xf]
      %v45 = vld [vmem:[%s2 + $0xc] sm:$0xf]
      %v46 = vld [vmem:[%s3] sm:$0x1]
      %v48 = vlaneseq
      %v49 = vshrl.u32 %v48, 7
      %v50 = vsub.s32 0, %v49
      %v51 = vrot.slane %v46, %v50
      %v57 = vunpack.c.l.b16 %v38
      %v58 = vunpack.c.l.b16 %v39
      %v59 = vunpack.c.l.b16 %v40
      %v60 = vunpack.c.l.b16 %v41
      %v61 = vpack.c.b16 %v58, %v57
      %v62 = vpack.c.b16 %v60, %v59
      %v67 = vunpack.c.l.b16 %v42
      %v68 = vunpack.c.l.b16 %v43
      %v69 = vunpack.c.l.b16 %v44
      %v70 = vunpack.c.l.b16 %v45
      %v71 = vpack.c.b16 %v68, %v67
      %v72 = vpack.c.b16 %v70, %v69
      %vm75 = vcmask 261120
      %v77 = vsel %vm75, %v61, 0
      %v80 = vsel %vm75, %v62, 0
      %82 = vmatprep.subr.bf16.mxu0 0
      %83 = vmatpush1.bf16.msra.mxu0 %v71
      %84 = vmatprep.subr.bf16.mxu0 0
      %85 = vmatpush1.bf16.msra.mxu0 %v72
      %86 = vmatprep.subr.bf16.mxu0 0
      %87 = vmatpush1.bf16.msra.mxu0 0
      %88 = vmatprep.subr.bf16.mxu0 0
      %89 = vmatpush1.bf16.msra.mxu0 0
      %90 = vmatprep.subr.bf16.mxu0 0
      %91 = vmatpush1.bf16.msra.mxu0 0
      %92 = vmatprep.subr.bf16.mxu0 0
      %93 = vmatpush1.bf16.msra.mxu0 0
      %94 = vmatprep.subr.bf16.mxu0 0
      %95 = vmatpush1.bf16.msra.mxu0 0
      %96 = vmatprep.subr.bf16.mxu0 0
      %97 = vmatpush1.bf16.msra.mxu0 0
      %98 = vmatprep.subr.bf16.mxu0 0
      %99 = vmatpush1.bf16.msra.mxu0 0
      %100 = vmatprep.subr.bf16.mxu0 0
      %101 = vmatpush1.bf16.msra.mxu0 0
      %102 = vmatprep.subr.bf16.mxu0 0
      %103 = vmatpush1.bf16.msra.mxu0 0
      %104 = vmatprep.subr.bf16.mxu0 0
      %105 = vmatpush1.bf16.msra.mxu0 0
      %106 = vmatprep.subr.bf16.mxu0 0
      %107 = vmatpush1.bf16.msra.mxu0 0
      %108 = vmatprep.subr.bf16.mxu0 0
      %109 = vmatpush1.bf16.msra.mxu0 0
      %110 = vmatprep.subr.bf16.mxu0 0
      %111 = vmatpush1.bf16.msra.mxu0 0
      %112 = vmatprep.subr.bf16.mxu0 0
      %113 = vmatpush1.bf16.msra.mxu0 0
      %114 = vmatprep.mubr.bf16.mxu0 0
      %115 = vmatmul.mubr.bf16.gmra.mrb[0].mxu0 %v77
      %v116 = vpop.f32.mrb[0].mxu0
      %v117 = vadd.f32 %v51, %v116
      %v118 = vpop.f32.mrb[0].mxu0
      %v119 = vpop.f32.mrb[0].mxu0
      %v120 = vadd.f32 %v51, %v119
      %v121 = vpop.f32.mrb[0].mxu0
      %122 = vmatprep.mubr.bf16.mxu0 0
      %123 = vmatmul.mubr.bf16.gmra.mrb[0].mxu0 %v80
      %v124 = vpop.f32.mrb[0].mxu0
      %v125 = vadd.f32 %v51, %v124
      %v126 = vpop.f32.mrb[0].mxu0
      %v127 = vpop.f32.mrb[0].mxu0
      %v128 = vadd.f32 %v51, %v127
      %v129 = vpop.f32.mrb[0].mxu0
      %130 = vdwg.mxu0
      %s131 = smul.u32 0, 32
      %v132 = vlaneseq
      %v133 = vshrl.u32 %v132, 7
      %v134 = vadd.s32 %v133, 8
      %v135 = vadd.s32 %v133, 16
      %v136 = vadd.s32 %v133, 24
      %v137 = vstv %s131
      %v138 = vadd.s32 %v137, %v133
      %v139 = vadd.s32 %v137, %v134
      %v140 = vadd.s32 %v137, %v135
      %v141 = vadd.s32 %v137, %v136
      %vm142 = vcmp.lt.s32.totalorder %v138, 32
      %vm143 = vcmp.lt.s32.totalorder %v139, 32
      %vm144 = vcmp.lt.s32.totalorder %v140, 32
      %vm145 = vcmp.lt.s32.totalorder %v141, 32
      %v146 = vld [vmem:[%s4] sm:$0xff]
      %v147 = vld [vmem:[%s4 + $0x8] sm:$0xff]
      %v148 = vld [vmem:[%s4 + $0x10] sm:$0xff]
      %v149 = vld [vmem:[%s4 + $0x18] sm:$0xff]
      %v150 = vsel %vm142, %v146, 0.0
      %v151 = vsel %vm143, %v147, 0.0
      %v152 = vsel %vm144, %v148, 0.0
      %v153 = vsel %vm145, %v149, 0.0
      %vm154 = vcmp.gt.f32.partialorder %v150, 0.5
      %vm155 = vcmp.gt.f32.partialorder %v151, 0.5
      %vm156 = vcmp.gt.f32.partialorder %v152, 0.5
      %vm157 = vcmp.gt.f32.partialorder %v153, 0.5
      %vm158 = vcmp.gt.f32.partialorder %v150, 1.5
      %vm159 = vcmp.gt.f32.partialorder %v151, 1.5
      %vm160 = vcmp.gt.f32.partialorder %v152, 1.5
      %vm161 = vcmp.gt.f32.partialorder %v153, 1.5
      %v162 = vsel %vm158, 1, 0
      %v163 = vsel %vm159, 1, 0
      %v164 = vsel %vm160, 1, 0
      %v165 = vsel %vm161, 1, 0
      %v166 = vcvt.s32.f32 %v162
      %v167 = vcvt.s32.f32 %v163
      %v168 = vcvt.s32.f32 %v164
      %v169 = vcvt.s32.f32 %v165
      %v170 = vsel %vm158, 1.0, 0.33333334
      %v171 = vsel %vm159, 1.0, 0.33333334
      %v172 = vsel %vm160, 1.0, 0.33333334
      %v173 = vsel %vm161, 1.0, 0.33333334
      %v174 = vmax.f32 %v117, 0.0
      %v175 = vmax.f32 %v120, 0.0
      %v176 = vmax.f32 %v125, 0.0
      %v177 = vmax.f32 %v128, 0.0
      %v178 = vmul.f32 %v117, %v166
      %v179 = vmul.f32 %v120, %v167
      %v180 = vmul.f32 %v125, %v168
      %v181 = vmul.f32 %v128, %v169
      %v182 = vsub.f32 %v174, %v178
      %v183 = vsub.f32 %v175, %v179
      %v184 = vsub.f32 %v176, %v180
      %v185 = vsub.f32 %v177, %v181
      %v186 = vand.u32 2147483647, %v117
      %v187 = vand.u32 2147483647, %v120
      %v188 = vand.u32 2147483647, %v125
      %v189 = vand.u32 2147483647, %v128
      %v190 = vsub.f32 0.0, %v186
      %v191 = vsub.f32 0.0, %v187
      %v192 = vsub.f32 0.0, %v188
      %v193 = vsub.f32 0.0, %v189
      %v194 = vmul.f32 %v190, 1.442695
      %v195 = vpow.pop %v194
      %v196 = vmul.f32 %v191, 1.442695
      %v197 = vpow.pop %v196
      %v198 = vmul.f32 %v192, 1.442695
      %v199 = vpow.pop %v198
      %v200 = vmul.f32 %v193, 1.442695
      %v201 = vpow.pop %v200
      %v202 = vadd.f32 %v195, 1.0
      %v203 = vadd.f32 %v197, 1.0
      %v204 = vadd.f32 %v199, 1.0
      %v205 = vadd.f32 %v201, 1.0
      %v206 = vlog2.pop %v202
      %v207 = vmul.f32 %v206, 0.6931472
      %v208 = vlog2.pop %v203
      %v209 = vmul.f32 %v208, 0.6931472
      %v210 = vlog2.pop %v204
      %v211 = vmul.f32 %v210, 0.6931472
      %v212 = vlog2.pop %v205
      %v213 = vmul.f32 %v212, 0.6931472
      %v214 = vadd.f32 %v182, %v207
      %v215 = vadd.f32 %v183, %v209
      %v216 = vadd.f32 %v184, %v211
      %v217 = vadd.f32 %v185, %v213
      %vm218 = vcmp.ge.f32.partialorder %v117, 0.5
      %vm219 = vcmp.ge.f32.partialorder %v120, 0.5
      %vm220 = vcmp.ge.f32.partialorder %v125, 0.5
      %vm221 = vcmp.ge.f32.partialorder %v128, 0.5
      %vm222 = vmxor %vm218, %vm158
      %vm223 = vmxor %vm219, %vm159
      %vm224 = vmxor %vm220, %vm160
      %vm225 = vmxor %vm221, %vm161
      %vm226 = vmxor %vm222, 1
      %vm227 = vmxor %vm223, 1
      %vm228 = vmxor %vm224, 1
      %vm229 = vmxor %vm225, 1
      %v230 = vld [vmem:[#allocation4] sm:$0x1]
      %v231 = vmul.f32 %v170, %v214
      %v232 = vmul.f32 %v171, %v215
      %v233 = vmul.f32 %v172, %v216
      %v234 = vmul.f32 %v173, %v217
      %v235 = vsel %vm154, %v231, 0.0
      %v236 = vsel %vm155, %v232, 0.0
      %v237 = vsel %vm156, %v233, 0.0
      %v238 = vsel %vm157, %v234, 0.0
      %vm239 = vcmask 31744
      %v240 = vsel %vm239, %v235, 0.0
      %v241 = vsel %vm239, %v236, 0.0
      %v242 = vadd.f32 %v240, %v241
      %v243 = vsel %vm239, %v237, 0.0
      %v244 = vadd.f32 %v242, %v243
      %v245 = vsel %vm239, %v238, 0.0
      %v246 = vadd.f32 %v244, %v245
      %247 = vadd.xlane.f32.xlu0 %v246
      %v248 = vpop.xlane.xlu0 %247
      %v249 = vrot.slane %v248, 4
      %v250 = vadd.f32 %v248, %v249
      %v251 = vrot.slane %v250, 2
      %v252 = vadd.f32 %v250, %v251
      %v253 = vrot.slane %v252, 1
      %v254 = vadd.f32 %v252, %v253
      %s255 = vtos %v254
      %v256 = vstv %s255
      %v257 = vadd.f32 %v230, %v256
      %vm258 = vcmask 0
      %259 = vst.msk [vmem:[#allocation4] sm:$0x1] %vm258, %v257
      %v260 = vld [vmem:[#allocation6] sm:$0x1]
      %vm261 = vmand %vm154, %vm226
      %vm262 = vmand %vm155, %vm227
      %vm263 = vmand %vm156, %vm228
      %vm264 = vmand %vm157, %vm229
      %v265 = vsel %vm261, 1.0, 0.0
      %v266 = vsel %vm262, 1.0, 0.0
      %v267 = vsel %vm263, 1.0, 0.0
      %v268 = vsel %vm264, 1.0, 0.0
      %v269 = vsel %vm239, %v265, 0.0
      %v270 = vsel %vm239, %v266, 0.0
      %v271 = vadd.f32 %v269, %v270
      %v272 = vsel %vm239, %v267, 0.0
      %v273 = vadd.f32 %v271, %v272
      %v274 = vsel %vm239, %v268, 0.0
      %v275 = vadd.f32 %v273, %v274
      %276 = vadd.xlane.f32.xlu0 %v275
      %v277 = vpop.xlane.xlu0 %276
      %v278 = vrot.slane %v277, 4
      %v279 = vadd.f32 %v277, %v278
      %v280 = vrot.slane %v279, 2
      %v281 = vadd.f32 %v279, %v280
      %v282 = vrot.slane %v281, 1
      %v283 = vadd.f32 %v281, %v282
      %s284 = vtos %v283
      %v285 = vstv %s284
      %v286 = vadd.f32 %v260, %v285
      %287 = vst.msk [vmem:[#allocation6] sm:$0x1] %vm258, %v286
      %v288 = vld [vmem:[#allocation8] sm:$0x1]
      %v289 = vsel %vm154, 1.0, 0.0
      %v290 = vsel %vm155, 1.0, 0.0
      %v291 = vsel %vm156, 1.0, 0.0
      %v292 = vsel %vm157, 1.0, 0.0
      %v293 = vsel %vm239, %v289, 0.0
      %v294 = vsel %vm239, %v290, 0.0
      %v295 = vadd.f32 %v293, %v294
      %v296 = vsel %vm239, %v291, 0.0
      %v297 = vadd.f32 %v295, %v296
      %v298 = vsel %vm239, %v292, 0.0
      %v299 = vadd.f32 %v297, %v298
      %300 = vadd.xlane.f32.xlu0 %v299
      %v301 = vpop.xlane.xlu0 %300
      %v302 = vrot.slane %v301, 4
      %v303 = vadd.f32 %v301, %v302
      %v304 = vrot.slane %v303, 2
      %v305 = vadd.f32 %v303, %v304
      %v306 = vrot.slane %v305, 1
      %v307 = vadd.f32 %v305, %v306
      %s308 = vtos %v307
      %v309 = vstv %s308
      %v310 = vadd.f32 %v288, %v309
      %311 = vst.msk [vmem:[#allocation8] sm:$0x1] %vm258, %v310
    $region25: #{oracle_binary_classifier_forward.1} parent=1 // pred_fallthru
      _
    // Predicated region
    $region26: #{oracle_binary_classifier_forward.1} parent=1 // pred_check
      _
    $region27: #{oracle_binary_classifier_forward.1} parent=1 // pred_check_branch
      %313 = sbr.rel (0) target = $region29
    $region28: #{oracle_binary_classifier_forward.1} parent=1 // pred_region
      %s315 = ssub.s32 16, 16
      %316 = vsyncadd [#allocation5], %s315
      %s318 = sshll.u32 [#allocation4], 4
      %s319 = int_to_ptr.vmem [resolvable:$true] %s318
      %321 = dma.vmem_to_hbm [thread:$0]  %s319, 16, %s5, [#allocation5]
    $region29: #{oracle_binary_classifier_forward.1} parent=1 // pred_fallthru
      _
    // Predicated region
    $region30: #{oracle_binary_classifier_forward.1} parent=1 // pred_check
      _
    $region31: #{oracle_binary_classifier_forward.1} parent=1 // pred_check_branch
      %323 = sbr.rel (0) target = $region33
    $region32: #{oracle_binary_classifier_forward.1} parent=1 // pred_region
      %s325 = ssub.s32 16, 16
      %326 = vsyncadd [#allocation7], %s325
      %s328 = sshll.u32 [#allocation6], 4
      %s329 = int_to_ptr.vmem [resolvable:$true] %s328
      %331 = dma.vmem_to_hbm [thread:$0]  %s329, 16, %s6, [#allocation7]
    $region33: #{oracle_binary_classifier_forward.1} parent=1 // pred_fallthru
      _
    // Predicated region
    $region34: #{oracle_binary_classifier_forward.1} parent=1 // pred_check
      _
    $region35: #{oracle_binary_classifier_forward.1} parent=1 // pred_check_branch
      %333 = sbr.rel (0) target = $region37
    $region36: #{oracle_binary_classifier_forward.1} parent=1 // pred_region
      %s335 = ssub.s32 16, 16
      %336 = vsyncadd [#allocation7], %s335
      %s338 = sshll.u32 [#allocation8], 4
      %s339 = int_to_ptr.vmem [resolvable:$true] %s338
      %341 = dma.vmem_to_hbm [thread:$0]  %s339, 16, %s7, [#allocation7]
    $region37: #{oracle_binary_classifier_forward.1} parent=1 // pred_fallthru
      _
    // Predicated region
    $region38: #{oracle_binary_classifier_forward.1} parent=1 // pred_check
      _
    $region39: #{oracle_binary_classifier_forward.1} parent=1 // pred_check_branch
      %343 = sbr.rel (0) target = $region41
    $region40: #{oracle_binary_classifier_forward.1} parent=1 // pred_region
      %344 = dma.done [#allocation5], 16
    $region41: #{oracle_binary_classifier_forward.1} parent=1 // pred_fallthru
      _
    // Predicated region
    $region42: #{oracle_binary_classifier_forward.1} parent=1 // pred_check
      _
    $region43: #{oracle_binary_classifier_forward.1} parent=1 // pred_check_branch
      %346 = sbr.rel (0) target = $region45
    $region44: #{oracle_binary_classifier_forward.1} parent=1 // pred_region
      %347 = dma.done [#allocation7], 16
    $region45: #{oracle_binary_classifier_forward.1} parent=1 // pred_fallthru
      _
    // Predicated region
    $region46: #{oracle_binary_classifier_forward.1} parent=1 // pred_check
      _
    $region47: #{oracle_binary_classifier_forward.1} parent=1 // pred_check_branch
      %349 = sbr.rel (0) target = $region49
    $region48: #{oracle_binary_classifier_forward.1} parent=1 // pred_region
      %350 = dma.done [#allocation7], 16
    $region49: #{oracle_binary_classifier_forward.1} parent=1 // pred_fallthru
      _
    %351 = vsyncpa [#allocation5], 1
    %352 = vsyncpa [#allocation7], 1

</llo_original>
